<compile_context>
chip_gen: v7x
topology: tpu7x:2x2x1
jax: 0.10.0
libtpu: 0.0.40
codegen_flags: <defaults>
</compile_context>

<pallas_src>
import functools
import math

import jax
import jax.numpy as jnp
from jax.experimental import pallas as pl
from jax.experimental.pallas import tpu as pltpu


def _round_up(x, m):
    return ((x + m - 1) // m) * m


def _expand_att_matrix(att):
    """(heads, f_out) attention vector -> (heads*f_out, heads) block matrix M with
    M[h*f_out + d, h] = att[h, d], so `feat @ M` computes every per-head alpha
    reduction in a single MXU matmul (no per-head lane slicing in the kernel)."""
    h, f = att.shape
    eye = jnp.eye(h, dtype=att.dtype)
    return (att[:, :, None] * eye[:, None, :]).reshape(h * f, h)


# ----------------------------------------------------------------- kernel A --
def _gat_project_kernel(x_ref, w_ref, amat_ref, feat_ref, alpha_ref):
    feat = jnp.dot(x_ref[...], w_ref[...], preferred_element_type=jnp.float32)
    # Both per-head alpha reductions (src and dst) in one MXU matmul.
    alpha_ref[...] = jnp.dot(feat, amat_ref[...],
                             preferred_element_type=jnp.float32)
    # bf16 features + trailing ones column: kernel B's aggregation matmul then
    # produces the softmax denominator for free (deferred normalization).
    ones = jnp.ones((feat.shape[0], 1), jnp.float32)
    feat_ref[...] = jnp.concatenate([feat, ones], axis=-1).astype(jnp.bfloat16)


# ----------------------------------------------------------------- kernel B --
def _gat_attention_kernel(adj_ref, adst_ref, asrc_t_ref, feat_ref, bias_ref,
                          out_ref, acc_ref, den_ref, m_ref, *,
                          heads, f_out, apply_elu, neg_slope):
    j = pl.program_id(1)
    hf = heads * f_out

    @pl.when(j == 0)
    def _():
        m_ref[...] = jnp.full_like(m_ref, -jnp.inf)
        den_ref[...] = jnp.zeros_like(den_ref)
        acc_ref[...] = jnp.zeros_like(acc_ref)

    adj = adj_ref[...]                              # (TILE_I, TILE_J) int8
    # Additive mask hoisted out of the per-head loop (one select per tile).
    madd = jnp.where(adj > 0, 0.0, -1e30)           # (TILE_I, TILE_J) f32
    a_dst = adst_ref[...]                           # (TILE_I, heads)  f32
    a_src_t = asrc_t_ref[...]                       # (heads, TILE_J)  f32, lane-dense
    feat_aug = feat_ref[...]                        # (TILE_J, hf+1)   bf16, last col = 1

    for h in range(heads):
        # e[i, j] = LeakyReLU(alpha_dst[i] + alpha_src[j]) + mask
        e = a_dst[:, h:h + 1] + a_src_t[h:h + 1, :]                # (TILE_I, TILE_J)
        e = jnp.where(e > 0, e, neg_slope * e)
        e = e + madd

        # Online (flash-style) softmax statistics, normalization deferred.
        m_prev = m_ref[:, h:h + 1]
        m_new = jnp.maximum(m_prev, jnp.max(e, axis=-1, keepdims=True))
        p = jnp.exp(e - m_new)                                     # unnormalized probs
        corr = jnp.exp(m_prev - m_new)                             # (TILE_I, 1)

        # One bf16 MXU matmul per head (f32 accumulate); the trailing ones column
        # of feat_aug yields the running denominator -- no XLU lane-sum, no p*recip.
        r = jnp.dot(p.astype(jnp.bfloat16), feat_aug,
                    preferred_element_type=jnp.float32)            # (TILE_I, hf+1)
        sl = slice(h * f_out, (h + 1) * f_out)
        acc_ref[:, sl] = acc_ref[:, sl] * corr + r[:, sl]
        den_ref[:, h:h + 1] = den_ref[:, h:h + 1] * corr + r[:, hf:hf + 1]
        m_ref[:, h:h + 1] = m_new

    @pl.when(j == pl.num_programs(1) - 1)
    def _():
        # Normalize on the small (TILE_I, hf) domain; reciprocal goes to the EUP slot.
        inv = pl.reciprocal(den_ref[...], approx=True)             # (TILE_I, heads)
        cols = [acc_ref[:, h * f_out:(h + 1) * f_out] * inv[:, h:h + 1]
                for h in range(heads)]
        out = cols[0] if heads == 1 else jnp.concatenate(cols, axis=-1)
        out = out + bias_ref[...]                                  # (1, hf)
        if apply_elu:
            # ELU(alpha=1); exp on min(x, 0) avoids exp of large positives.
            out = jnp.where(out > 0, out, jnp.exp(jnp.minimum(out, 0.0)) - 1.0)
        out_ref[...] = out.astype(out_ref.dtype)                   # single slab store


# ------------------------------------------------------------------ wrapper --
def gat_conv_pallas(x, adj, w, att_src, att_dst, bias, *, heads, f_out,
                    apply_elu, row_tile=256, col_tile=512, neg_slope=0.2,
                    vmem_limit_bytes=64 * 1024 * 1024):
    n, f_in = x.shape
    assert adj.shape == (n, n)
    assert row_tile % 32 == 0, "row_tile must be a multiple of 32 (int8 sublane tiling)"
    assert col_tile % 128 == 0, "col_tile must be a multiple of 128 (lane tiling)"
    hf = heads * f_out

    tile_lcm = row_tile * col_tile // math.gcd(row_tile, col_tile)
    n_pad = _round_up(n, tile_lcm)
    if n_pad != n:
        # Padded rows/cols have adj == 0 -> masked out; padded outputs are sliced off.
        x = jnp.pad(x, ((0, n_pad - n), (0, 0)))
        adj = jnp.pad(adj, ((0, n_pad - n), (0, n_pad - n)))

    # Merged (src | dst) alpha-reduction matrix -> one kernel-A matmul, one output.
    amat = jnp.concatenate(
        [_expand_att_matrix(att_src), _expand_att_matrix(att_dst)], axis=-1)  # (hf, 2h)

    # Kernel A: projection + alpha reductions, hoisted out of the attention tiling.
    feat_aug, alpha = pl.pallas_call(
        _gat_project_kernel,
        out_shape=(jax.ShapeDtypeStruct((n_pad, hf + 1), jnp.bfloat16),
                   jax.ShapeDtypeStruct((n_pad, 2 * heads), jnp.float32)),
        grid_spec=pltpu.PrefetchScalarGridSpec(
            num_scalar_prefetch=0,
            grid=(n_pad // row_tile,),
            in_specs=[
                pl.BlockSpec((row_tile, f_in), lambda i: (i, 0)),     # x rows
                pl.BlockSpec((f_in, hf), lambda i: (0, 0)),           # W (resident)
                pl.BlockSpec((hf, 2 * heads), lambda i: (0, 0)),      # merged att matrix
            ],
            out_specs=[
                pl.BlockSpec((row_tile, hf + 1), lambda i: (i, 0)),   # feat_aug (bf16)
                pl.BlockSpec((row_tile, 2 * heads), lambda i: (i, 0)),
            ]),
        compiler_params=pltpu.CompilerParams(
            dimension_semantics=("parallel",),
            vmem_limit_bytes=vmem_limit_bytes),
    )(x, w, amat)

    # Source-major, lane-dense alpha_src; tiny wrapper-side transpose/split.
    a_src_t = jnp.transpose(alpha[:, :heads])       # (heads, n_pad)
    a_dst = alpha[:, heads:]                        # (n_pad, heads)
    bias_flat = bias.reshape(1, hf)

    # Kernel B: destination-row x source-column tiled masked attention.
    kernel = functools.partial(_gat_attention_kernel, heads=heads, f_out=f_out,
                               apply_elu=apply_elu, neg_slope=neg_slope)
    out = pl.pallas_call(
        kernel,
        out_shape=jax.ShapeDtypeStruct((n_pad, hf), jnp.float32),
        grid_spec=pltpu.PrefetchScalarGridSpec(
            num_scalar_prefetch=0,
            grid=(n_pad // row_tile, n_pad // col_tile),
            in_specs=[
                pl.BlockSpec((row_tile, col_tile), lambda i, j: (i, j)),  # adj (int8)
                pl.BlockSpec((row_tile, heads), lambda i, j: (i, 0)),     # alpha_dst
                pl.BlockSpec((heads, col_tile), lambda i, j: (0, j)),     # alpha_src^T
                pl.BlockSpec((col_tile, hf + 1), lambda i, j: (j, 0)),    # feat_aug (bf16)
                pl.BlockSpec((1, hf), lambda i, j: (0, 0)),               # bias
            ],
            out_specs=pl.BlockSpec((row_tile, hf), lambda i, j: (i, 0)),
            scratch_shapes=[
                pltpu.VMEM((row_tile, hf), jnp.float32),     # acc (unnormalized outputs)
                pltpu.VMEM((row_tile, heads), jnp.float32),  # denominators
                pltpu.VMEM((row_tile, heads), jnp.float32),  # running max
            ]),
        compiler_params=pltpu.CompilerParams(
            dimension_semantics=("parallel", "arbitrary"),
            vmem_limit_bytes=vmem_limit_bytes),
    )(adj, a_dst, a_src_t, feat_aug, bias_flat)

    return out[:n]


def gat_forward(x, edge_index, params, *, heads, hidden, num_classes,
                row_tile=256, col_tile=512):
    """Forward pass of GAT (eval mode: dropouts are identity)."""
    n = x.shape[0]
    src, dst = edge_index[0], edge_index[1]
    # Dense int8 adjacency adj[dst, src] = 1, plus self-loops (PyG default).
    adj = jnp.zeros((n, n), jnp.int8).at[dst, src].set(1)
    adj = jnp.maximum(adj, jnp.eye(n, dtype=jnp.int8))

    # x = F.dropout(x, training=False)  -> identity
    h = gat_conv_pallas(x, adj, params["w1"], params["as1"], params["ad1"],
                        params["b1"], heads=heads, f_out=hidden,
                        apply_elu=True, row_tile=row_tile, col_tile=col_tile)
    # h = F.dropout(h, training=False)  -> identity
    out = gat_conv_pallas(h, adj, params["w2"], params["as2"], params["ad2"],
                          params["b2"], heads=1, f_out=num_classes,
                          apply_elu=False, row_tile=row_tile, col_tile=col_tile)
    return out


# --------------------------------------------------------- pure-JAX reference --
def _gat_conv_ref(x, adj, w, att_src, att_dst, bias, *, heads, f_out,
                  apply_elu, neg_slope=0.2):
    n = x.shape[0]
    feat = (x @ w).reshape(n, heads, f_out)
    a_src = jnp.einsum("nhf,hf->nh", feat, att_src)
    a_dst = jnp.einsum("nhf,hf->nh", feat, att_dst)
    e = a_dst[:, None, :] + a_src[None, :, :]          # (dst, src, heads)
    e = jnp.where(e > 0, e, neg_slope * e)
    e = jnp.where((adj > 0)[:, :, None], e, -jnp.inf)
    att = jax.nn.softmax(e, axis=1)
    out = jnp.einsum("ijh,jhf->ihf", att, feat).reshape(n, heads * f_out)
    out = out + bias.reshape(1, -1)
    if apply_elu:
        out = jnp.where(out > 0, out, jnp.exp(jnp.minimum(out, 0.0)) - 1.0)
    return out


def _gat_forward_ref(x, edge_index, params, *, heads, hidden, num_classes):
    n = x.shape[0]
    src, dst = edge_index[0], edge_index[1]
    adj = jnp.zeros((n, n), jnp.int8).at[dst, src].set(1)
    adj = jnp.maximum(adj, jnp.eye(n, dtype=jnp.int8))
    h = _gat_conv_ref(x, adj, params["w1"], params["as1"], params["ad1"],
                      params["b1"], heads=heads, f_out=hidden, apply_elu=True)
    return _gat_conv_ref(h, adj, params["w2"], params["as2"], params["ad2"],
                         params["b2"], heads=1, f_out=num_classes, apply_elu=False)


if __name__ == "__main__":
    # Small synthetic graph consistent with the module:
    #   num_features=16, hidden_channels=8, heads=4, num_classes=4, N=256 nodes.
    # row_tile=64, col_tile=128 -> kernel-B grid (4, 2): exercises the parallel row
    # axis AND the online-softmax source-tile axis.
    N, F_IN, HIDDEN, HEADS, NUM_CLASSES, N_EDGES = 256, 16, 8, 4, 4, 1024
    ROW_TILE, COL_TILE = 64, 128

    key = jax.random.PRNGKey(0)
    kx, ke1, ke2, kw1, ka1, kb1, kc1, kw2, ka2, kb2, kc2 = jax.random.split(key, 11)

    x = jax.random.normal(kx, (N, F_IN), dtype=jnp.float32)
    edge_index = jnp.stack([
        jax.random.randint(ke1, (N_EDGES,), 0, N),   # src
        jax.random.randint(ke2, (N_EDGES,), 0, N),   # dst
    ]).astype(jnp.int32)

    params = {
        # conv1: GATConv(in=F_IN, out=HIDDEN, heads=HEADS), concat=True
        "w1":  0.1 * jax.random.normal(kw1, (F_IN, HEADS * HIDDEN), jnp.float32),
        "as1": 0.1 * jax.random.normal(ka1, (HEADS, HIDDEN), jnp.float32),
        "ad1": 0.1 * jax.random.normal(kb1, (HEADS, HIDDEN), jnp.float32),
        "b1":  0.1 * jax.random.normal(kc1, (HEADS, HIDDEN), jnp.float32),
        # conv2: GATConv(in=HEADS*HIDDEN, out=NUM_CLASSES, heads=1)
        "w2":  0.1 * jax.random.normal(kw2, (HEADS * HIDDEN, NUM_CLASSES), jnp.float32),
        "as2": 0.1 * jax.random.normal(ka2, (1, NUM_CLASSES), jnp.float32),
        "ad2": 0.1 * jax.random.normal(kb2, (1, NUM_CLASSES), jnp.float32),
        "b2":  0.1 * jax.random.normal(kc2, (1, NUM_CLASSES), jnp.float32),
    }

    out = gat_forward(x, edge_index, params, heads=HEADS, hidden=HIDDEN,
                      num_classes=NUM_CLASSES, row_tile=ROW_TILE, col_tile=COL_TILE)
    jax.block_until_ready(out)
    assert out.shape == (N, NUM_CLASSES)
    assert bool(jnp.all(jnp.isfinite(out)))

    ref = _gat_forward_ref(x, edge_index, params, heads=HEADS, hidden=HIDDEN,
                           num_classes=NUM_CLASSES)
    err = float(jnp.max(jnp.abs(out - ref)))
    # bf16 attention/aggregation + approx reciprocal -> loose tolerance.
    assert err < 5e-2, f"max abs error vs reference: {err}"
    print("KERNEL_OK")
</pallas_src>

<mosaic_0001>
module attributes {stable_mosaic.version = 11 : i64} {
  func.func @_gat_project_kernel(%arg0: i32, %arg1: memref<64x16xf32, #tpu.memory_space<vmem>>, %arg2: memref<16x32xf32, #tpu.memory_space<vmem>>, %arg3: memref<32x8xf32, #tpu.memory_space<vmem>>, %arg4: memref<64x33xbf16, #tpu.memory_space<vmem>>, %arg5: memref<64x8xf32, #tpu.memory_space<vmem>>) attributes {dimension_semantics = [#tpu.dimension_semantics<parallel>], iteration_bounds = array<i64: 4>, scalar_prefetch = 0 : i64, scratch_operands = 0 : i64, tpu.core_type = #tpu.core_type<tc>, window_params = [{transform_indices = @transform_0, window_bounds = array<i64: 64, 16>}, {pipeline_mode = #tpu.pipeline_mode<synchronous>, transform_indices = @transform_1, window_bounds = array<i64: 16, 32>}, {pipeline_mode = #tpu.pipeline_mode<synchronous>, transform_indices = @transform_2, window_bounds = array<i64: 32, 8>}, {transform_indices = @transform_3, window_bounds = array<i64: 64, 33>}, {transform_indices = @transform_4, window_bounds = array<i64: 64, 8>}]} {
    %c0 = arith.constant 0 : index
    %c0_0 = arith.constant 0 : index
    %0 = vector.load %arg1[%c0, %c0_0] : memref<64x16xf32, #tpu.memory_space<vmem>>, vector<64x16xf32>
    %c0_1 = arith.constant 0 : index
    %c0_2 = arith.constant 0 : index
    %1 = vector.load %arg2[%c0_1, %c0_2] : memref<16x32xf32, #tpu.memory_space<vmem>>, vector<16x32xf32>
    %cst = arith.constant dense<0.000000e+00> : vector<64x32xf32>
    %2 = tpu.matmul %0, %1, %cst {dimension_numbers = #tpu.dot_dimension_numbers<[1], [0], [0], [1], [0, 0, 1, 1], [], []>} : vector<64x16xf32>, vector<16x32xf32>, vector<64x32xf32> -> vector<64x32xf32>
    %c0_3 = arith.constant 0 : index
    %c0_4 = arith.constant 0 : index
    %3 = vector.load %arg3[%c0_3, %c0_4] : memref<32x8xf32, #tpu.memory_space<vmem>>, vector<32x8xf32>
    %cst_5 = arith.constant dense<0.000000e+00> : vector<64x8xf32>
    %4 = tpu.matmul %2, %3, %cst_5 {dimension_numbers = #tpu.dot_dimension_numbers<[1], [0], [0], [1], [0, 0, 1, 1], [], []>} : vector<64x32xf32>, vector<32x8xf32>, vector<64x8xf32> -> vector<64x8xf32>
    %c0_6 = arith.constant 0 : index
    %c0_7 = arith.constant 0 : index
    %5 = vector.load %arg5[%c0_6, %c0_7] : memref<64x8xf32, #tpu.memory_space<vmem>>, vector<64x8xf32>
    tpu.vector_store %arg5[%c0_6, %c0_7], %4 {strides = array<i32>} : memref<64x8xf32, #tpu.memory_space<vmem>>, vector<64x8xf32>,
    %cst_8 = arith.constant 1.000000e+00 : f32
    %6 = vector.broadcast %cst_8 : f32 to vector<64x1xf32>
    %7 = tpu.concatenate %2, %6 in 1 : vector<64x32xf32>, vector<64x1xf32> -> vector<64x33xf32>
    %8 = arith.truncf %7 : vector<64x33xf32> to vector<64x33xbf16>
    %c0_9 = arith.constant 0 : index
    %c0_10 = arith.constant 0 : index
    %9 = vector.load %arg4[%c0_9, %c0_10] : memref<64x33xbf16, #tpu.memory_space<vmem>>, vector<64x33xbf16>
    tpu.vector_store %arg4[%c0_9, %c0_10], %8 {strides = array<i32>} : memref<64x33xbf16, #tpu.memory_space<vmem>>, vector<64x33xbf16>,
    return
  }
  func.func @transform_0(%arg0: i32) -> (i32, i32) {
    %c0_i32 = arith.constant 0 : i32
    %c0_i32_0 = arith.constant 0 : i32
    return %arg0, %c0_i32 : i32, i32
  }
  func.func @transform_1(%arg0: i32) -> (i32, i32) {
    %c0_i32 = arith.constant 0 : i32
    %c0_i32_0 = arith.constant 0 : i32
    %c0_i32_1 = arith.constant 0 : i32
    return %c0_i32, %c0_i32_0 : i32, i32
  }
  func.func @transform_2(%arg0: i32) -> (i32, i32) {
    %c0_i32 = arith.constant 0 : i32
    %c0_i32_0 = arith.constant 0 : i32
    %c0_i32_1 = arith.constant 0 : i32
    return %c0_i32, %c0_i32_0 : i32, i32
  }
  func.func @transform_3(%arg0: i32) -> (i32, i32) {
    %c0_i32 = arith.constant 0 : i32
    %c0_i32_0 = arith.constant 0 : i32
    return %arg0, %c0_i32 : i32, i32
  }
  func.func @transform_4(%arg0: i32) -> (i32, i32) {
    %c0_i32 = arith.constant 0 : i32
    %c0_i32_0 = arith.constant 0 : i32
    return %arg0, %c0_i32 : i32, i32
  }
}

</mosaic_0001>

<llo_original>
// kernel: tpu_custom_call.1
$region0: #{tpu_custom_call.1}
  #allocation0 [shape = 'u32[]', space=smem, size = 0x4, offset = 0x4, fixed_abs, tag = 'smem constant byte address 0x4 - core index']
  #allocation1 [shape = 'u32[144,128]{1,0:T(1,128)}', space=vmem, size = 0x12000, scoped, tag = 'internal scratch']
  %s0 = inlined_call_operand.hbm [shape: f32[256,16], index: 0, kind: input, shape index: {}]
  %s1 = inlined_call_operand.hbm [shape: f32[16,32], index: 1, kind: input, shape index: {}]
  %s2 = inlined_call_operand.hbm [shape: f32[32,8], index: 2, kind: input, shape index: {}]
  %s3 = inlined_call_operand.hbm [shape: bf16[256,33], index: 3, kind: output, shape index: {0}]
  %s4 = inlined_call_operand.hbm [shape: f32[256,8], index: 4, kind: output, shape index: {1}]
  %5 = xla_tuple %s3, %s4
  %s6 = sld [smem:[#allocation0]]
  $region65: #{tpu_custom_call.1} parent=0
    _
  %s8 = ssub.s32 1, %s6
  %s9 = scalar_select 0, %s8, %s6
  $region1: #{tpu_custom_call.1} parent=0
    #allocation2 [shape = 'u8[65536]{0}', space=vmem, size = 0x10000, scoped, tag = 'input window, operand 0']
    #allocation3 [shape = 's32[2]{0}', space=sflag, size = 0x8, scoped, tag = 'scoped memory for tpu_custom_call.1']
    #allocation4 [shape = 's32[2]{0}', space=sflag, size = 0x8, scoped, tag = 'scoped memory for tpu_custom_call.1']
    #allocation5 [shape = 'u8[8192]{0}', space=vmem, size = 0x2000, scoped, tag = 'input window, operand 1, single buffered']
    #allocation6 [shape = 's32[1]{0}', space=sflag, size = 0x4, scoped, tag = 'scoped memory for tpu_custom_call.1']
    #allocation7 [shape = 'u8[16384]{0}', space=vmem, size = 0x4000, scoped, tag = 'input window, operand 2, single buffered']
    #allocation8 [shape = 'u8[32768]{0}', space=vmem, size = 0x8000, scoped, tag = 'output window, operand 0']
    #allocation9 [shape = 'u8[65536]{0}', space=vmem, size = 0x10000, scoped, tag = 'output window, operand 1']
    #allocation10 [shape = 's32[2]{0}', space=sflag, size = 0x8, scoped, tag = 'scoped memory for tpu_custom_call.1']
    %10 = vsyncpa [#allocation3], 0
    %s11 = scalar_lea.sflag [#allocation3], 1
    %12 = vsyncpa %s11, 0
    %13 = vsyncpa [#allocation6], 0
    %14 = vsyncpa [#allocation4], 0
    %s15 = scalar_lea.sflag [#allocation4], 1
    %16 = vsyncpa %s15, 0
    %17 = vsyncpa [#allocation10], 0
    %s18 = scalar_lea.sflag [#allocation10], 1
    %19 = vsyncpa %s18, 0
    loop: start=0, step=1, limit=6
    $region2: #{tpu_custom_call.1} parent=1 // loop_pre_header
      _
    $region3: #{tpu_custom_call.1} parent=1 // loop_header
      %s21 = sphi 0, %s25
      %p22 = scmp.ge.s32.totalorder %s21, 6
      %s31 = sphi 0, %s33
      %s34 = sphi 0, %s31
      %s35 = sphi 0, %s34
      %s51 = sphi 0, %s35
      %s55 = sphi 0, %s55
      %s57 = sphi 0, %s55
      %s58 = sphi 0, %s57
      %s72 = sphi 0, %s58
      %s76 = sphi 0, %s76
      %s78 = sphi 0, %s76
      %s79 = sphi 0, %s78
      %s93 = sphi 0, %s79
      %s99 = sphi 0, %s101
      %s102 = sphi 0, %s99
      %s103 = sphi 0, %s102
      %s119 = sphi 0, %s103
      %s125 = sphi 0, %s127
      %s128 = sphi 0, %s125
      %s129 = sphi 0, %s128
      %s145 = sphi 0, %s129
    $region4: #{tpu_custom_call.1} parent=1 // loop_header_branch
      %24 = sbr.rel (%p22) target = $region8
    $region5: #{tpu_custom_call.1} parent=1 // loop_body
      %s26 = ssub.s32 %s21, 1
      %s27 = ssub.s32 %s21, 2
      %s28 = sadd.s32 %s21, 1
      %s29 = ssub.s32 %s21, %s28
      %p30 = scmp.eq.s32.totalorder %s29, 0
      %s32 = sadd.s32 %s31, 1
      %s33 = scalar_select %p30, %s31, %s32
      %p36 = pneg %p30
      %p37 = scmp.eq.s32.totalorder %s21, 3
      %p38 = por %p36, %p37
      %p39 = scmp.ne.s32.totalorder %s31, %s34
      %p40 = scmp.eq.s32.totalorder %s21, 0
      %p41 = por %p39, %p40
      %p42 = scmp.ne.s32.totalorder %s31, %s34
      %p43 = scmp.eq.s32.totalorder %s26, 3
      %p44 = por %p42, %p43
      %p45 = scmp.ne.s32.totalorder %s34, %s35
      %p46 = scmp.eq.s32.totalorder %s26, 0
      %p47 = por %p45, %p46
      %p48 = scmp.ne.s32.totalorder %s34, %s35
      %p49 = scmp.eq.s32.totalorder %s27, 3
      %p50 = por %p48, %p49
      %p52 = scmp.ne.s32.totalorder %s35, %s51
      %p53 = scmp.eq.s32.totalorder %s27, 0
      %p54 = por %p52, %p53
      %s56 = sadd.s32 %s55, 1
      %p59 = scmp.eq.s32.totalorder %s21, 3
      %p60 = scmp.ne.s32.totalorder %s55, %s57
      %p61 = scmp.eq.s32.totalorder %s21, 0
      %p62 = por %p60, %p61
      %p63 = scmp.ne.s32.totalorder %s55, %s57
      %p64 = scmp.eq.s32.totalorder %s26, 3
      %p65 = por %p63, %p64
      %p66 = scmp.ne.s32.totalorder %s57, %s58
      %p67 = scmp.eq.s32.totalorder %s26, 0
      %p68 = por %p66, %p67
      %p69 = scmp.ne.s32.totalorder %s57, %s58
      %p70 = scmp.eq.s32.totalorder %s27, 3
      %p71 = por %p69, %p70
      %p73 = scmp.ne.s32.totalorder %s58, %s72
      %p74 = scmp.eq.s32.totalorder %s27, 0
      %p75 = por %p73, %p74
      %s77 = sadd.s32 %s76, 1
      %p80 = scmp.eq.s32.totalorder %s21, 3
      %p81 = scmp.ne.s32.totalorder %s76, %s78
      %p82 = scmp.eq.s32.totalorder %s21, 0
      %p83 = por %p81, %p82
      %p84 = scmp.ne.s32.totalorder %s76, %s78
      %p85 = scmp.eq.s32.totalorder %s26, 3
      %p86 = por %p84, %p85
      %p87 = scmp.ne.s32.totalorder %s78, %s79
      %p88 = scmp.eq.s32.totalorder %s26, 0
      %p89 = por %p87, %p88
      %p90 = scmp.ne.s32.totalorder %s78, %s79
      %p91 = scmp.eq.s32.totalorder %s27, 3
      %p92 = por %p90, %p91
      %p94 = scmp.ne.s32.totalorder %s79, %s93
      %p95 = scmp.eq.s32.totalorder %s27, 0
      %p96 = por %p94, %p95
      %s97 = ssub.s32 %s21, %s28
      %p98 = scmp.eq.s32.totalorder %s97, 0
      %s100 = sadd.s32 %s99, 1
      %s101 = scalar_select %p98, %s99, %s100
      %p104 = pneg %p98
      %p105 = scmp.eq.s32.totalorder %s21, 3
      %p106 = por %p104, %p105
      %p107 = scmp.ne.s32.totalorder %s99, %s102
      %p108 = scmp.eq.s32.totalorder %s21, 0
      %p109 = por %p107, %p108
      %p110 = scmp.ne.s32.totalorder %s99, %s102
      %p111 = scmp.eq.s32.totalorder %s26, 3
      %p112 = por %p110, %p111
      %p113 = scmp.ne.s32.totalorder %s102, %s103
      %p114 = scmp.eq.s32.totalorder %s26, 0
      %p115 = por %p113, %p114
      %p116 = scmp.ne.s32.totalorder %s102, %s103
      %p117 = scmp.eq.s32.totalorder %s27, 3
      %p118 = por %p116, %p117
      %p120 = scmp.ne.s32.totalorder %s103, %s119
      %p121 = scmp.eq.s32.totalorder %s27, 0
      %p122 = por %p120, %p121
      %s123 = ssub.s32 %s21, %s28
      %p124 = scmp.eq.s32.totalorder %s123, 0
      %s126 = sadd.s32 %s125, 1
      %s127 = scalar_select %p124, %s125, %s126
      %p130 = pneg %p124
      %p131 = scmp.eq.s32.totalorder %s21, 3
      %p132 = por %p130, %p131
      %p133 = scmp.ne.s32.totalorder %s125, %s128
      %p134 = scmp.eq.s32.totalorder %s21, 0
      %p135 = por %p133, %p134
      %p136 = scmp.ne.s32.totalorder %s125, %s128
      %p137 = scmp.eq.s32.totalorder %s26, 3
      %p138 = por %p136, %p137
      %p139 = scmp.ne.s32.totalorder %s128, %s129
      %p140 = scmp.eq.s32.totalorder %s26, 0
      %p141 = por %p139, %p140
      %p142 = scmp.ne.s32.totalorder %s128, %s129
      %p143 = scmp.eq.s32.totalorder %s27, 3
      %p144 = por %p142, %p143
      %p146 = scmp.ne.s32.totalorder %s129, %s145
      %p147 = scmp.eq.s32.totalorder %s27, 0
      %p148 = por %p146, %p147
      %p149 = scmp.le.s32.totalorder 1, %s21
      %p150 = scmp.lt.s32.totalorder %s21, 5
      %p151 = pnand %p149, %p150
      %p152 = pneg %p151
      // Predicated region
      $region9: #{tpu_custom_call.1} parent=5 // pred_check
        _
      $region10: #{tpu_custom_call.1} parent=5 // pred_check_branch
        %154 = sbr.rel (%p151) target = $region12
      $region11: #{tpu_custom_call.1} parent=5 // pred_region
        %s155 = ssub.s32 %s21, 1
        // Predicated region
        $region13: #{tpu_custom_call.1} parent=11 // pred_check
          %p156 = pneg %p68
        $region14: #{tpu_custom_call.1} parent=11 // pred_check_branch
          %158 = sbr.rel (%p156) target = $region16
        $region15: #{tpu_custom_call.1} parent=11 // pred_region
          %s160 = ssub.s32 256, 256
          %161 = vsyncadd [#allocation6], %s160
          %s162 = sshll.u32 [#allocation5], 4
          %s163 = int_to_ptr.vmem [resolvable:$true] %s162
          %168 = dma.hbm_to_vmem [thread:$0]  %s1, 256, %s163, [#allocation6], 128, 128, 8
        $region16: #{tpu_custom_call.1} parent=11 // pred_fallthru
          _
        // Predicated region
        $region17: #{tpu_custom_call.1} parent=11 // pred_check
          %p169 = pneg %p89
        $region18: #{tpu_custom_call.1} parent=11 // pred_check_branch
          %171 = sbr.rel (%p169) target = $region20
        $region19: #{tpu_custom_call.1} parent=11 // pred_region
          %s173 = ssub.s32 512, 512
          %174 = vsyncadd [#allocation6], %s173
          %s175 = sshll.u32 [#allocation7], 4
          %s176 = int_to_ptr.vmem [resolvable:$true] %s175
          %181 = dma.hbm_to_vmem [thread:$0]  %s2, 512, %s176, [#allocation6], 128, 128, 8
        $region20: #{tpu_custom_call.1} parent=11 // pred_fallthru
          _
      $region12: #{tpu_custom_call.1} parent=5 // pred_fallthru
        _
      %p182 = scmp.lt.s32.totalorder %s21, 4
      // Predicated region
      $region21: #{tpu_custom_call.1} parent=5 // pred_check
        %p183 = pneg %p182
      $region22: #{tpu_custom_call.1} parent=5 // pred_check_branch
        %185 = sbr.rel (%p183) target = $region24
      $region23: #{tpu_custom_call.1} parent=5 // pred_region
        // Predicated region
        $region25: #{tpu_custom_call.1} parent=23 // pred_check
          %p186 = pneg %p41
        $region26: #{tpu_custom_call.1} parent=23 // pred_check_branch
          %188 = sbr.rel (%p186) target = $region28
        $region27: #{tpu_custom_call.1} parent=23 // pred_region
          %s189 = sand.u32 %s31, 1
          %s190 = scalar_lea.sflag [#allocation3], %s189
          %s191 = sand.u32 %s31, 1
          %s192 = smul.addr %s191, 64
          %s193 = scalar_lea.vmem [#allocation2], %s192
          %s194 = smul.u32 8, %s21
          %s196 = ssub.s32 1024, 1024
          %197 = vsyncadd %s190, %s196
          %s198 = smul.addr %s194, 128
          %s199 = scalar_lea.hbm %s0, %s198
          %s200 = sshll.u32 %s193, 4
          %s201 = int_to_ptr.vmem [resolvable:$true] %s200
          %206 = dma.hbm_to_vmem [thread:$0]  %s199, 1024, %s201, %s190, 128, 128, 8
        $region28: #{tpu_custom_call.1} parent=23 // pred_fallthru
          _
      $region24: #{tpu_custom_call.1} parent=5 // pred_fallthru
        _
      %p207 = scmp.le.s32.totalorder 1, %s21
      %p208 = scmp.lt.s32.totalorder %s21, 5
      %p209 = pnand %p207, %p208
      %p210 = pneg %p209
      // Predicated region
      $region29: #{tpu_custom_call.1} parent=5 // pred_check
        _
      $region30: #{tpu_custom_call.1} parent=5 // pred_check_branch
        %212 = sbr.rel (%p209) target = $region32
      $region31: #{tpu_custom_call.1} parent=5 // pred_region
        %s213 = ssub.s32 %s21, 1
        %s214 = sand.u32 %s34, 1
        %s215 = scalar_lea.sflag [#allocation3], %s214
        %s216 = sand.u32 %s34, 1
        %s217 = smul.addr %s216, 64
        %s218 = scalar_lea.vmem [#allocation2], %s217
        // Predicated region
        $region33: #{tpu_custom_call.1} parent=31 // pred_check
          %p219 = pneg %p47
        $region34: #{tpu_custom_call.1} parent=31 // pred_check_branch
          %221 = sbr.rel (%p219) target = $region36
        $region35: #{tpu_custom_call.1} parent=31 // pred_region
          %222 = dma.done %s215, 1024
        $region36: #{tpu_custom_call.1} parent=31 // pred_fallthru
          _
        // Predicated region
        $region37: #{tpu_custom_call.1} parent=31 // pred_check
          %p223 = pneg %p68
        $region38: #{tpu_custom_call.1} parent=31 // pred_check_branch
          %225 = sbr.rel (%p223) target = $region40
        $region39: #{tpu_custom_call.1} parent=31 // pred_region
          %226 = dma.done [#allocation6], 256
        $region40: #{tpu_custom_call.1} parent=31 // pred_fallthru
          _
        // Predicated region
        $region41: #{tpu_custom_call.1} parent=31 // pred_check
          %p227 = pneg %p89
        $region42: #{tpu_custom_call.1} parent=31 // pred_check_branch
          %229 = sbr.rel (%p227) target = $region44
        $region43: #{tpu_custom_call.1} parent=31 // pred_region
          %230 = dma.done [#allocation6], 512
        $region44: #{tpu_custom_call.1} parent=31 // pred_fallthru
          _
        %s231 = sand.u32 %s34, 1
        %s232 = scalar_lea.sflag [#allocation3], %s231
        %s233 = sand.u32 %s34, 1
        %s234 = smul.addr %s233, 64
        %s235 = scalar_lea.vmem [#allocation2], %s234
        %p236 = pneg %p47
        %p237 = pneg %p44
        %p238 = pneg %p68
        %p239 = pneg %p65
        %p240 = pneg %p89
        %p241 = pneg %p86
        %p242 = pneg %p115
        %p243 = pneg %p112
        %s244 = sand.u32 %s102, 1
        %s245 = scalar_lea.sflag [#allocation4], %s244
        %s246 = sand.u32 %s102, 1
        %s247 = smul.addr %s246, 32
        %s248 = scalar_lea.vmem [#allocation8], %s247
        %p249 = pneg %p141
        %p250 = pneg %p138
        %s251 = sand.u32 %s128, 1
        %s252 = scalar_lea.sflag [#allocation10], %s251
        %s253 = sand.u32 %s128, 1
        %s254 = smul.addr %s253, 64
        %s255 = scalar_lea.vmem [#allocation9], %s254
        %s256 = smul.u32 8, %s26
        %s257 = smul.u32 8, %s26
        %s258 = smul.u32 8, %s26
        %v259 = vld [vmem:[%s218] sm:$0xff]
        %v260 = vld [vmem:[%s218 + $0x8] sm:$0xff]
        %v261 = vld [vmem:[%s218 + $0x10] sm:$0xff]
        %v262 = vld [vmem:[%s218 + $0x18] sm:$0xff]
        %v263 = vld [vmem:[%s218 + $0x20] sm:$0xff]
        %v264 = vld [vmem:[%s218 + $0x28] sm:$0xff]
        %v265 = vld [vmem:[%s218 + $0x30] sm:$0xff]
        %v266 = vld [vmem:[%s218 + $0x38] sm:$0xff]
        %v267 = vld [vmem:[#allocation5] sm:$0xff]
        %v268 = vld [vmem:[#allocation5 + $0x8] sm:$0xff]
        %vm269 = vcmask 130048
        %v271 = vsel %vm269, %v259, 0
        %v274 = vsel %vm269, %v260, 0
        %v277 = vsel %vm269, %v261, 0
        %v280 = vsel %vm269, %v262, 0
        %v283 = vsel %vm269, %v263, 0
        %v286 = vsel %vm269, %v264, 0
        %v289 = vsel %vm269, %v265, 0
        %v292 = vsel %vm269, %v266, 0
        %294 = vmatprep.subr.mxu0 0.0
        %295 = vmatpush1.msra.mxu0 %v267
        %296 = vmatprep.subr.mxu0 0.0
        %297 = vmatpush1.msra.mxu0 %v268
        %298 = vmatprep.subr.mxu0 0.0
        %299 = vmatpush1.msra.mxu0 0.0
        %300 = vmatprep.subr.mxu0 0.0
        %301 = vmatpush1.msra.mxu0 0.0
        %302 = vmatprep.subr.mxu0 0.0
        %303 = vmatpush1.msra.mxu0 0.0
        %304 = vmatprep.subr.mxu0 0.0
        %305 = vmatpush1.msra.mxu0 0.0
        %306 = vmatprep.subr.mxu0 0.0
        %307 = vmatpush1.msra.mxu0 0.0
        %308 = vmatprep.subr.mxu0 0.0
        %309 = vmatpush1.msra.mxu0 0.0
        %310 = vmatprep.subr.mxu0 0.0
        %311 = vmatpush1.msra.mxu0 0.0
        %312 = vmatprep.subr.mxu0 0.0
        %313 = vmatpush1.msra.mxu0 0.0
        %314 = vmatprep.subr.mxu0 0.0
        %315 = vmatpush1.msra.mxu0 0.0
        %316 = vmatprep.subr.mxu0 0.0
        %317 = vmatpush1.msra.mxu0 0.0
        %318 = vmatprep.subr.mxu0 0.0
        %319 = vmatpush1.msra.mxu0 0.0
        %320 = vmatprep.subr.mxu0 0.0
        %321 = vmatpush1.msra.mxu0 0.0
        %322 = vmatprep.subr.mxu0 0.0
        %323 = vmatpush1.msra.mxu0 0.0
        %324 = vmatprep.subr.mxu0 0.0
        %325 = vmatpush1.msra.mxu0 0.0
        %326 = vmatprep.subr.mxu0 0.0
        %327 = vmatpush1.msra.mxu0 0.0
        %328 = vmatprep.subr.mxu0 0.0
        %329 = vmatpush1.msra.mxu0 0.0
        %330 = vmatprep.subr.mxu0 0.0
        %331 = vmatpush1.msra.mxu0 0.0
        %332 = vmatprep.subr.mxu0 0.0
        %333 = vmatpush1.msra.mxu0 0.0
        %334 = vmatprep.subr.mxu0 0.0
        %335 = vmatpush1.msra.mxu0 0.0
        %336 = vmatprep.subr.mxu0 0.0
        %337 = vmatpush1.msra.mxu0 0.0
        %338 = vmatprep.subr.mxu0 0.0
        %339 = vmatpush1.msra.mxu0 0.0
        %340 = vmatprep.subr.mxu0 0.0
        %341 = vmatpush1.msra.mxu0 0.0
        %342 = vmatprep.subr.mxu0 0.0
        %343 = vmatpush1.msra.mxu0 0.0
        %344 = vmatprep.subr.mxu0 0.0
        %345 = vmatpush1.msra.mxu0 0.0
        %346 = vmatprep.subr.mxu0 0.0
        %347 = vmatpush1.msra.mxu0 0.0
        %348 = vmatprep.subr.mxu0 0.0
        %349 = vmatpush1.msra.mxu0 0.0
        %350 = vmatprep.subr.mxu0 0.0
        %351 = vmatpush1.msra.mxu0 0.0
        %352 = vmatprep.subr.mxu0 0.0
        %353 = vmatpush1.msra.mxu0 0.0
        %354 = vmatprep.subr.mxu0 0.0
        %355 = vmatpush1.msra.mxu0 0.0
        %356 = vmatprep.subr.mxu0 0.0
        %357 = vmatpush1.msra.mxu0 0.0
        %358 = vmatprep.mubr.f32.mxu0 0.0
        %359 = vmatmul.mubr.f32.gmra.mrb[0].mxu0 %v271
        %v360 = vpop.f32.mrb[0].mxu0
        %v361 = vadd.f32 0.0, %v360
        %v362 = vpop.f32.mrb[0].mxu0
        %363 = vmatprep.mubr.f32.mxu0 0.0
        %364 = vmatmul.mubr.f32.gmra.mrb[0].mxu0 %v274
        %v365 = vpop.f32.mrb[0].mxu0
        %v366 = vadd.f32 0.0, %v365
        %v367 = vpop.f32.mrb[0].mxu0
        %368 = vmatprep.mubr.f32.mxu0 0.0
        %369 = vmatmul.mubr.f32.gmra.mrb[0].mxu0 %v277
        %v370 = vpop.f32.mrb[0].mxu0
        %v371 = vadd.f32 0.0, %v370
        %v372 = vpop.f32.mrb[0].mxu0
        %373 = vmatprep.mubr.f32.mxu0 0.0
        %374 = vmatmul.mubr.f32.gmra.mrb[0].mxu0 %v280
        %v375 = vpop.f32.mrb[0].mxu0
        %v376 = vadd.f32 0.0, %v375
        %v377 = vpop.f32.mrb[0].mxu0
        %378 = vmatprep.mubr.f32.mxu0 0.0
        %379 = vmatmul.mubr.f32.gmra.mrb[0].mxu0 %v283
        %v380 = vpop.f32.mrb[0].mxu0
        %v381 = vadd.f32 0.0, %v380
        %v382 = vpop.f32.mrb[0].mxu0
        %383 = vmatprep.mubr.f32.mxu0 0.0
        %384 = vmatmul.mubr.f32.gmra.mrb[0].mxu0 %v286
        %v385 = vpop.f32.mrb[0].mxu0
        %v386 = vadd.f32 0.0, %v385
        %v387 = vpop.f32.mrb[0].mxu0
        %388 = vmatprep.mubr.f32.mxu0 0.0
        %389 = vmatmul.mubr.f32.gmra.mrb[0].mxu0 %v289
        %v390 = vpop.f32.mrb[0].mxu0
        %v391 = vadd.f32 0.0, %v390
        %v392 = vpop.f32.mrb[0].mxu0
        %393 = vmatprep.mubr.f32.mxu0 0.0
        %394 = vmatmul.mubr.f32.gmra.mrb[0].mxu0 %v292
        %v395 = vpop.f32.mrb[0].mxu0
        %v396 = vadd.f32 0.0, %v395
        %v397 = vpop.f32.mrb[0].mxu0
        %398 = vdwg.mxu0
        %v399 = vld [vmem:[#allocation7] sm:$0xff]
        %v400 = vld [vmem:[#allocation7 + $0x8] sm:$0xff]
        %v401 = vld [vmem:[#allocation7 + $0x10] sm:$0xff]
        %v402 = vld [vmem:[#allocation7 + $0x18] sm:$0xff]
        %vm403 = vcmask 261120
        %v405 = vsel %vm403, %v361, 0
        %v408 = vsel %vm403, %v366, 0
        %v411 = vsel %vm403, %v371, 0
        %v414 = vsel %vm403, %v376, 0
        %v417 = vsel %vm403, %v381, 0
        %v420 = vsel %vm403, %v386, 0
        %v423 = vsel %vm403, %v391, 0
        %v426 = vsel %vm403, %v396, 0
        %428 = vmatprep.subr.mxu0 0.0
        %429 = vmatpush1.msra.mxu0 %v399
        %430 = vmatprep.subr.mxu0 0.0
        %431 = vmatpush1.msra.mxu0 %v400
        %432 = vmatprep.subr.mxu0 0.0
        %433 = vmatpush1.msra.mxu0 %v401
        %434 = vmatprep.subr.mxu0 0.0
        %435 = vmatpush1.msra.mxu0 %v402
        %436 = vmatprep.subr.mxu0 0.0
        %437 = vmatpush1.msra.mxu0 0.0
        %438 = vmatprep.subr.mxu0 0.0
        %439 = vmatpush1.msra.mxu0 0.0
        %440 = vmatprep.subr.mxu0 0.0
        %441 = vmatpush1.msra.mxu0 0.0
        %442 = vmatprep.subr.mxu0 0.0
        %443 = vmatpush1.msra.mxu0 0.0
        %444 = vmatprep.subr.mxu0 0.0
        %445 = vmatpush1.msra.mxu0 0.0
        %446 = vmatprep.subr.mxu0 0.0
        %447 = vmatpush1.msra.mxu0 0.0
        %448 = vmatprep.subr.mxu0 0.0
        %449 = vmatpush1.msra.mxu0 0.0
        %450 = vmatprep.subr.mxu0 0.0
        %451 = vmatpush1.msra.mxu0 0.0
        %452 = vmatprep.subr.mxu0 0.0
        %453 = vmatpush1.msra.mxu0 0.0
        %454 = vmatprep.subr.mxu0 0.0
        %455 = vmatpush1.msra.mxu0 0.0
        %456 = vmatprep.subr.mxu0 0.0
        %457 = vmatpush1.msra.mxu0 0.0
        %458 = vmatprep.subr.mxu0 0.0
        %459 = vmatpush1.msra.mxu0 0.0
        %460 = vmatprep.subr.mxu0 0.0
        %461 = vmatpush1.msra.mxu0 0.0
        %462 = vmatprep.subr.mxu0 0.0
        %463 = vmatpush1.msra.mxu0 0.0
        %464 = vmatprep.subr.mxu0 0.0
        %465 = vmatpush1.msra.mxu0 0.0
        %466 = vmatprep.subr.mxu0 0.0
        %467 = vmatpush1.msra.mxu0 0.0
        %468 = vmatprep.subr.mxu0 0.0
        %469 = vmatpush1.msra.mxu0 0.0
        %470 = vmatprep.subr.mxu0 0.0
        %471 = vmatpush1.msra.mxu0 0.0
        %472 = vmatprep.subr.mxu0 0.0
        %473 = vmatpush1.msra.mxu0 0.0
        %474 = vmatprep.subr.mxu0 0.0
        %475 = vmatpush1.msra.mxu0 0.0
        %476 = vmatprep.subr.mxu0 0.0
        %477 = vmatpush1.msra.mxu0 0.0
        %478 = vmatprep.subr.mxu0 0.0
        %479 = vmatpush1.msra.mxu0 0.0
        %480 = vmatprep.subr.mxu0 0.0
        %481 = vmatpush1.msra.mxu0 0.0
        %482 = vmatprep.subr.mxu0 0.0
        %483 = vmatpush1.msra.mxu0 0.0
        %484 = vmatprep.subr.mxu0 0.0
        %485 = vmatpush1.msra.mxu0 0.0
        %486 = vmatprep.subr.mxu0 0.0
        %487 = vmatpush1.msra.mxu0 0.0
        %488 = vmatprep.subr.mxu0 0.0
        %489 = vmatpush1.msra.mxu0 0.0
        %490 = vmatprep.subr.mxu0 0.0
        %491 = vmatpush1.msra.mxu0 0.0
        %492 = vmatprep.mubr.f32.mxu0 0.0
        %493 = vmatmul.mubr.f32.gmra.mrb[0].mxu0 %v405
        %v494 = vpop.f32.mrb[0].mxu0
        %v495 = vadd.f32 0.0, %v494
        %v496 = vpop.f32.mrb[0].mxu0
        %497 = vmatprep.mubr.f32.mxu0 0.0
        %498 = vmatmul.mubr.f32.gmra.mrb[0].mxu0 %v408
        %v499 = vpop.f32.mrb[0].mxu0
        %v500 = vadd.f32 0.0, %v499
        %v501 = vpop.f32.mrb[0].mxu0
        %502 = vmatprep.mubr.f32.mxu0 0.0
        %503 = vmatmul.mubr.f32.gmra.mrb[0].mxu0 %v411
        %v504 = vpop.f32.mrb[0].mxu0
        %v505 = vadd.f32 0.0, %v504
        %v506 = vpop.f32.mrb[0].mxu0
        %507 = vmatprep.mubr.f32.mxu0 0.0
        %508 = vmatmul.mubr.f32.gmra.mrb[0].mxu0 %v414
        %v509 = vpop.f32.mrb[0].mxu0
        %v510 = vadd.f32 0.0, %v509
        %v511 = vpop.f32.mrb[0].mxu0
        %512 = vmatprep.mubr.f32.mxu0 0.0
        %513 = vmatmul.mubr.f32.gmra.mrb[0].mxu0 %v417
        %v514 = vpop.f32.mrb[0].mxu0
        %v515 = vadd.f32 0.0, %v514
        %v516 = vpop.f32.mrb[0].mxu0
        %517 = vmatprep.mubr.f32.mxu0 0.0
        %518 = vmatmul.mubr.f32.gmra.mrb[0].mxu0 %v420
        %v519 = vpop.f32.mrb[0].mxu0
        %v520 = vadd.f32 0.0, %v519
        %v521 = vpop.f32.mrb[0].mxu0
        %522 = vmatprep.mubr.f32.mxu0 0.0
        %523 = vmatmul.mubr.f32.gmra.mrb[0].mxu0 %v423
        %v524 = vpop.f32.mrb[0].mxu0
        %v525 = vadd.f32 0.0, %v524
        %v526 = vpop.f32.mrb[0].mxu0
        %527 = vmatprep.mubr.f32.mxu0 0.0
        %528 = vmatmul.mubr.f32.gmra.mrb[0].mxu0 %v426
        %v529 = vpop.f32.mrb[0].mxu0
        %v530 = vadd.f32 0.0, %v529
        %v531 = vpop.f32.mrb[0].mxu0
        %532 = vdwg.mxu0
        %vm533 = vcmask 64512
        %534 = vst.msk [vmem:[%s255] sm:$0xff] %vm533, %v495
        %535 = vst.msk [vmem:[%s255 + $0x8] sm:$0xff] %vm533, %v500
        %536 = vst.msk [vmem:[%s255 + $0x10] sm:$0xff] %vm533, %v505
        %537 = vst.msk [vmem:[%s255 + $0x18] sm:$0xff] %vm533, %v510
        %538 = vst.msk [vmem:[%s255 + $0x20] sm:$0xff] %vm533, %v515
        %539 = vst.msk [vmem:[%s255 + $0x28] sm:$0xff] %vm533, %v520
        %540 = vst.msk [vmem:[%s255 + $0x30] sm:$0xff] %vm533, %v525
        %541 = vst.msk [vmem:[%s255 + $0x38] sm:$0xff] %vm533, %v530
        %v542 = vsel %vm403, %v361, 1.0
        %v543 = vsel %vm403, %v366, 1.0
        %v544 = vsel %vm403, %v371, 1.0
        %v545 = vsel %vm403, %v376, 1.0
        %v546 = vsel %vm403, %v381, 1.0
        %v547 = vsel %vm403, %v386, 1.0
        %v548 = vsel %vm403, %v391, 1.0
        %v549 = vsel %vm403, %v396, 1.0
        %v550 = vpack.c.bf16 %v543, %v542
        %v551 = vpack.c.bf16 %v545, %v544
        %v552 = vpack.c.bf16 %v547, %v546
        %v553 = vpack.c.bf16 %v549, %v548
        %v558 = vunpack.c.l.b16 %v550
        %v559 = vunpack.c.h.b16 %v550
        %v560 = vunpack.c.l.b16 %v551
        %v561 = vunpack.c.h.b16 %v551
        %v562 = vunpack.c.l.b16 %v552
        %v563 = vunpack.c.h.b16 %v552
        %v564 = vunpack.c.l.b16 %v553
        %v565 = vunpack.c.h.b16 %v553
        %v566 = vpack.c.b16 %v558, %v558
        %v567 = vpack.c.b16 %v559, %v559
        %v568 = vpack.c.b16 %v560, %v560
        %v569 = vpack.c.b16 %v561, %v561
        %v570 = vpack.c.b16 %v562, %v562
        %v571 = vpack.c.b16 %v563, %v563
        %v572 = vpack.c.b16 %v564, %v564
        %v573 = vpack.c.b16 %v565, %v565
        %vm582 = vcmask 265216
        %583 = vst.msk [vmem:[%s248] sm:$0xf] %vm582, %v566
        %584 = vst.msk [vmem:[%s248 + $0x4] sm:$0xf] %vm582, %v567
        %585 = vst.msk [vmem:[%s248 + $0x8] sm:$0xf] %vm582, %v568
        %586 = vst.msk [vmem:[%s248 + $0xc] sm:$0xf] %vm582, %v569
        %587 = vst.msk [vmem:[%s248 + $0x10] sm:$0xf] %vm582, %v570
        %588 = vst.msk [vmem:[%s248 + $0x14] sm:$0xf] %vm582, %v571
        %589 = vst.msk [vmem:[%s248 + $0x18] sm:$0xf] %vm582, %v572
        %590 = vst.msk [vmem:[%s248 + $0x1c] sm:$0xf] %vm582, %v573
        %s591 = sand.u32 %s102, 1
        %s592 = scalar_lea.sflag [#allocation4], %s591
        %s593 = sand.u32 %s102, 1
        %s594 = smul.addr %s593, 32
        %s595 = scalar_lea.vmem [#allocation8], %s594
        %s596 = sand.u32 %s128, 1
        %s597 = scalar_lea.sflag [#allocation10], %s596
        %s598 = sand.u32 %s128, 1
        %s599 = smul.addr %s598, 64
        %s600 = scalar_lea.vmem [#allocation9], %s599
        // Predicated region
        $region45: #{tpu_custom_call.1} parent=31 // pred_check
          %p601 = pneg %p112
        $region46: #{tpu_custom_call.1} parent=31 // pred_check_branch
          %603 = sbr.rel (%p601) target = $region48
        $region47: #{tpu_custom_call.1} parent=31 // pred_region
          %s604 = smul.u32 8, %s26
          %s606 = ssub.s32 512, 512
          %607 = vsyncadd %s592, %s606
          %s608 = smul.addr %s604, 64
          %s609 = scalar_lea.hbm %s3, %s608
          %s610 = sshll.u32 %s595, 4
          %s611 = int_to_ptr.vmem [resolvable:$true] %s610
          %616 = dma.vmem_to_hbm [thread:$0]  %s611, 512, %s609, %s592, 64, 64, 4
        $region48: #{tpu_custom_call.1} parent=31 // pred_fallthru
          _
        // Predicated region
        $region49: #{tpu_custom_call.1} parent=31 // pred_check
          %p617 = pneg %p138
        $region50: #{tpu_custom_call.1} parent=31 // pred_check_branch
          %619 = sbr.rel (%p617) target = $region52
        $region51: #{tpu_custom_call.1} parent=31 // pred_region
          %s620 = smul.u32 8, %s26
          %s622 = ssub.s32 1024, 1024
          %623 = vsyncadd %s597, %s622
          %s624 = smul.addr %s620, 128
          %s625 = scalar_lea.hbm %s4, %s624
          %s626 = sshll.u32 %s600, 4
          %s627 = int_to_ptr.vmem [resolvable:$true] %s626
          %632 = dma.vmem_to_hbm [thread:$0]  %s627, 1024, %s625, %s597, 128, 128, 8
        $region52: #{tpu_custom_call.1} parent=31 // pred_fallthru
          _
      $region32: #{tpu_custom_call.1} parent=5 // pred_fallthru
        _
      %p633 = scmp.le.s32.totalorder 2, %s21
      // Predicated region
      $region53: #{tpu_custom_call.1} parent=5 // pred_check
        %p634 = pneg %p633
      $region54: #{tpu_custom_call.1} parent=5 // pred_check_branch
        %636 = sbr.rel (%p634) target = $region56
      $region55: #{tpu_custom_call.1} parent=5 // pred_region
        %s637 = ssub.s32 %s21, 2
        // Predicated region
        $region57: #{tpu_custom_call.1} parent=55 // pred_check
          %p638 = pneg %p118
        $region58: #{tpu_custom_call.1} parent=55 // pred_check_branch
          %640 = sbr.rel (%p638) target = $region60
        $region59: #{tpu_custom_call.1} parent=55 // pred_region
          %s641 = sand.u32 %s103, 1
          %s642 = scalar_lea.sflag [#allocation4], %s641
          %s643 = sand.u32 %s103, 1
          %s644 = smul.addr %s643, 32
          %s645 = scalar_lea.vmem [#allocation8], %s644
          %646 = dma.done %s642, 512
        $region60: #{tpu_custom_call.1} parent=55 // pred_fallthru
          _
        // Predicated region
        $region61: #{tpu_custom_call.1} parent=55 // pred_check
          %p647 = pneg %p144
        $region62: #{tpu_custom_call.1} parent=55 // pred_check_branch
          %649 = sbr.rel (%p647) target = $region64
        $region63: #{tpu_custom_call.1} parent=55 // pred_region
          %s650 = sand.u32 %s129, 1
          %s651 = scalar_lea.sflag [#allocation10], %s650
          %s652 = sand.u32 %s129, 1
          %s653 = smul.addr %s652, 64
          %s654 = scalar_lea.vmem [#allocation9], %s653
          %655 = dma.done %s651, 1024
        $region64: #{tpu_custom_call.1} parent=55 // pred_fallthru
          _
      $region56: #{tpu_custom_call.1} parent=5 // pred_fallthru
        _
    $region6: #{tpu_custom_call.1} parent=1 // loop_footer
      %s25 = sadd.s32 1, %s21
    $region7: #{tpu_custom_call.1} parent=1 // loop_footer_branch
      %20 = sbr.rel target = $region3
    $region8: #{tpu_custom_call.1} parent=1 // loop_exit
      _
    %656 = vsyncpa [#allocation3], 1
    %s657 = scalar_lea.sflag [#allocation3], 1
    %658 = vsyncpa %s657, 1
    %659 = vsyncpa [#allocation6], 1
    %660 = vsyncpa [#allocation4], 1
    %s661 = scalar_lea.sflag [#allocation4], 1
    %662 = vsyncpa %s661, 1
    %663 = vsyncpa [#allocation10], 1
    %s664 = scalar_lea.sflag [#allocation10], 1
    %665 = vsyncpa %s664, 1

</llo_original>
